<compile_context>
chip_gen: v5e
topology: v5e:2x2
jax: 0.10.0
libtpu: 0.0.40
codegen_flags: <defaults>
</compile_context>

<pallas_src>
import functools
import re

import jax
import jax.numpy as jnp
from jax.experimental import pallas as pl
from jax.experimental.pallas import tpu as pltpu

_LANES = 128
_SMALL_INPUT_BYTES = 64 * 1024  # below this, XLA's fused sigmoid wins outright


def _tpu_generation() -> int:
    """Best-effort TPU generation from device_kind ('TPU v5 lite' -> 5)."""
    try:
        kind = jax.devices()[0].device_kind
    except Exception:
        return 0
    m = re.search(r"(\d+)", kind)
    return int(m.group(1)) if m else 0


def _block_target_bytes(gen: int) -> int:
    # Per-generation streaming-block target.  Input + output double-buffered
    # residency is ~4x this and must fit the scoped-VMEM default.
    if gen >= 7:
        return 6 * 1024 * 1024   # ~1.9 us of DMA/step at 3.2 TB/s -> <10% overhead
    if gen == 6:
        return 4 * 1024 * 1024   # 16 MiB resident, inside the 32 MiB default
    return 2 * 1024 * 1024       # 8 MiB resident, inside v5e's 16 MiB default


def _sigmoid_kernel(x_ref, o_ref, *, compute_dtype):
    # sigmoid(x) = 0.5 * tanh(0.5 * x) + 0.5  -- single EUP transcendental,
    # no exact divide (matches XLA's own logistic lowering numerically).
    half = jnp.asarray(0.5, compute_dtype)
    x = x_ref[...].astype(compute_dtype)
    o_ref[...] = (half * jnp.tanh(half * x) + half).astype(o_ref.dtype)


def richness_attention(x: jax.Array) -> jax.Array:
    """Forward of RichnessAttentionModule: sigmoid(x). x: (B, C, H, W)."""
    orig_shape = x.shape
    dtype = x.dtype
    total = 1
    for d in orig_shape:
        total *= d
    itemsize = jnp.dtype(dtype).itemsize

    # Fast path 1: tiny tensors -- pallas_call launch + per-step overhead
    # dominates; let XLA fuse the sigmoid into neighboring ops.
    if total * itemsize < _SMALL_INPUT_BYTES:
        return jax.nn.sigmoid(x)

    # Fast path 2: flat length not a multiple of 128 lanes.  Any pad or
    # prefix-slice+concat workaround adds full extra HBM passes on a
    # bandwidth-bound op, so just use XLA's fused elementwise sigmoid.
    if total % _LANES != 0:
        return jax.nn.sigmoid(x)

    # Widest lane-dense last dim that divides the flat length exactly
    # (wide last dim -> unmasked full-width vst, fewer/bigger DMAs).
    cols = _LANES
    for c in (2048, 1024, 512, 256):
        if total % c == 0:
            cols = c
            break
    rows = total // cols

    gen = _tpu_generation()
    target_rows = max(8, (_block_target_bytes(gen) // (cols * itemsize)) // 8 * 8)
    # Either a single block equal to the full extent, or a multiple-of-8 row
    # block (ragged last block is OOB-clipped, which is safe for elementwise).
    block_rows = rows if target_rows >= rows else target_rows
    grid = (pl.cdiv(rows, block_rows),)

    # bf16 compute on bf16-capable VPU/EUP generations; f32 on v5e and older.
    if dtype == jnp.bfloat16 and gen >= 6:
        compute_dtype = jnp.bfloat16
    else:
        compute_dtype = jnp.float32

    x2d = jnp.reshape(x, (rows, cols))  # contiguous reshape: layout no-op

    out2d = pl.pallas_call(
        functools.partial(_sigmoid_kernel, compute_dtype=compute_dtype),
        out_shape=jax.ShapeDtypeStruct((rows, cols), dtype),
        grid_spec=pltpu.PrefetchScalarGridSpec(
            num_scalar_prefetch=0,
            grid=grid,
            in_specs=[pl.BlockSpec((block_rows, cols), lambda i: (i, 0))],
            out_specs=pl.BlockSpec((block_rows, cols), lambda i: (i, 0)),
        ),
        compiler_params=pltpu.CompilerParams(
            dimension_semantics=("parallel",),
        ),
    )(x2d)

    return jnp.reshape(out2d, orig_shape)


if __name__ == "__main__":
    key = jax.random.PRNGKey(0)
    k1, k2, k3, k4 = jax.random.split(key, 4)

    # 1) Tiny NCHW map consistent with the module's conv-style usage
    #    (takes the small-input fast path).
    x_small = jax.random.normal(k1, (2, 4, 16, 16), dtype=jnp.float32)
    out_small = jax.block_until_ready(richness_attention(x_small))
    ref_small = jax.nn.sigmoid(x_small)
    assert out_small.shape == x_small.shape and out_small.dtype == x_small.dtype
    assert jnp.allclose(out_small, ref_small, atol=1e-5, rtol=1e-5)

    # 2) Larger f32 activation that exercises the Pallas streaming path.
    x_f32 = jax.random.normal(k2, (2, 8, 32, 128), dtype=jnp.float32)
    out_f32 = jax.block_until_ready(richness_attention(x_f32))
    ref_f32 = jax.nn.sigmoid(x_f32)
    assert out_f32.shape == x_f32.shape and out_f32.dtype == x_f32.dtype
    assert jnp.allclose(out_f32, ref_f32, atol=1e-5, rtol=1e-5)

    # 3) bf16 activation (computes in bf16 on v6e/v7x, f32 on older chips).
    x_bf16 = jax.random.normal(k3, (2, 8, 32, 128), dtype=jnp.bfloat16)
    out_bf16 = jax.block_until_ready(richness_attention(x_bf16))
    ref_bf16 = jax.nn.sigmoid(x_bf16.astype(jnp.float32))
    assert out_bf16.shape == x_bf16.shape and out_bf16.dtype == jnp.bfloat16
    assert jnp.allclose(out_bf16.astype(jnp.float32), ref_bf16, atol=2e-2, rtol=2e-2)

    # 4) Non-lane-aligned flat length -> falls back to XLA's fused sigmoid.
    x_odd = jax.random.normal(k4, (1, 3, 99, 97), dtype=jnp.float32)
    out_odd = jax.block_until_ready(richness_attention(x_odd))
    assert jnp.allclose(out_odd, jax.nn.sigmoid(x_odd), atol=1e-5, rtol=1e-5)

    print("KERNEL_OK")
</pallas_src>

<mosaic_0001>
module attributes {stable_mosaic.version = 11 : i64} {
  func.func @_sigmoid_kernel(%arg0: i32, %arg1: memref<32x2048xf32, #tpu.memory_space<vmem>>, %arg2: memref<32x2048xf32, #tpu.memory_space<vmem>>) attributes {dimension_semantics = [#tpu.dimension_semantics<parallel>], iteration_bounds = array<i64: 1>, scalar_prefetch = 0 : i64, scratch_operands = 0 : i64, tpu.core_type = #tpu.core_type<tc>, window_params = [{transform_indices = @transform_0, window_bounds = array<i64: 32, 2048>}, {transform_indices = @transform_1, window_bounds = array<i64: 32, 2048>}]} {
    %c0 = arith.constant 0 : index
    %c0_0 = arith.constant 0 : index
    %0 = vector.load %arg1[%c0, %c0_0] : memref<32x2048xf32, #tpu.memory_space<vmem>>, vector<32x2048xf32>
    %cst = arith.constant 5.000000e-01 : f32
    %1 = vector.broadcast %cst : f32 to vector<32x2048xf32>
    %2 = arith.mulf %1, %0 : vector<32x2048xf32>
    %3 = math.tanh %2 : vector<32x2048xf32>
    %cst_1 = arith.constant 5.000000e-01 : f32
    %4 = vector.broadcast %cst_1 : f32 to vector<32x2048xf32>
    %5 = arith.mulf %4, %3 : vector<32x2048xf32>
    %cst_2 = arith.constant 5.000000e-01 : f32
    %6 = vector.broadcast %cst_2 : f32 to vector<32x2048xf32>
    %7 = arith.addf %5, %6 : vector<32x2048xf32>
    %c0_3 = arith.constant 0 : index
    %c0_4 = arith.constant 0 : index
    %8 = vector.load %arg2[%c0_3, %c0_4] : memref<32x2048xf32, #tpu.memory_space<vmem>>, vector<32x2048xf32>
    tpu.vector_store %arg2[%c0_3, %c0_4], %7 {strides = array<i32>} : memref<32x2048xf32, #tpu.memory_space<vmem>>, vector<32x2048xf32>,
    return
  }
  func.func @transform_0(%arg0: i32) -> (i32, i32) {
    %c0_i32 = arith.constant 0 : i32
    %c0_i32_0 = arith.constant 0 : i32
    return %arg0, %c0_i32 : i32, i32
  }
  func.func @transform_1(%arg0: i32) -> (i32, i32) {
    %c0_i32 = arith.constant 0 : i32
    %c0_i32_0 = arith.constant 0 : i32
    return %arg0, %c0_i32 : i32, i32
  }
}

</mosaic_0001>

<llo_original>
// kernel: tpu_custom_call.1
$region0: #{tpu_custom_call.1}
  #allocation0 [shape = 'u32[]', space=smem, size = 0x4, offset = 0x4, fixed_abs, tag = 'smem constant byte address 0x4 - core index']
  #allocation1 [shape = 'u32[72,128]{1,0:T(1,128)}', space=vmem, size = 0x9000, scoped, tag = 'internal scratch']
  %s0 = inlined_call_operand.hbm [shape: f32[32,2048], index: 0, kind: input, shape index: {}]
  %s1 = inlined_call_operand.hbm [shape: f32[32,2048], index: 1, kind: output, shape index: {}]
  %s2 = sld [smem:[#allocation0]]
  $region18: #{tpu_custom_call.1} parent=0
    _
  %s4 = ssub.s32 1, %s2
  %s5 = scalar_select 0, %s4, %s2
  $region1: #{tpu_custom_call.1} parent=0
    #allocation2 [shape = 'u8[262144]{0}', space=vmem, size = 0x40000, scoped, tag = 'input window, operand 0, single buffered']
    #allocation3 [shape = 's32[1]{0}', space=sflag, size = 0x4, scoped, tag = 'scoped memory for tpu_custom_call.1']
    #allocation4 [shape = 's32[1]{0}', space=sflag, size = 0x4, scoped, tag = 'scoped memory for tpu_custom_call.1']
    #allocation5 [shape = 'u8[262144]{0}', space=vmem, size = 0x40000, scoped, tag = 'output window, operand 0, single buffered']
    %6 = vsyncpa [#allocation3], 0
    %7 = vsyncpa [#allocation4], 0
    // Predicated region
    $region2: #{tpu_custom_call.1} parent=1 // pred_check
      _
    $region3: #{tpu_custom_call.1} parent=1 // pred_check_branch
      %9 = sbr.rel (0) target = $region5
    $region4: #{tpu_custom_call.1} parent=1 // pred_region
      %11 = vsyncadd [#allocation3], 0
      %s12 = sshll.u32 %s0, 4
      %s13 = int_to_ptr.hbm [resolvable:$true] %s12
      %s14 = sshll.u32 [#allocation2], 4
      %s15 = int_to_ptr.vmem [resolvable:$true] %s14
      %20 = dma.hbm_to_vmem [thread:$0]  %s13, 8192, %s15, [#allocation3], 2048, 2048, 128
    $region5: #{tpu_custom_call.1} parent=1 // pred_fallthru
      _
    // Predicated region
    $region6: #{tpu_custom_call.1} parent=1 // pred_check
      _
    $region7: #{tpu_custom_call.1} parent=1 // pred_check_branch
      %22 = sbr.rel (0) target = $region9
    $region8: #{tpu_custom_call.1} parent=1 // pred_region
      %24 = dma.done [#allocation3], 8192
    $region9: #{tpu_custom_call.1} parent=1 // pred_fallthru
      _
    %v25 = vld [vmem:[#allocation2] sm:$0xff]
    %v26 = vld [vmem:[#allocation2 + $0x8] sm:$0xff]
    %v27 = vld [vmem:[#allocation2 + $0x10] sm:$0xff]
    %v28 = vld [vmem:[#allocation2 + $0x18] sm:$0xff]
    %v29 = vld [vmem:[#allocation2 + $0x20] sm:$0xff]
    %v30 = vld [vmem:[#allocation2 + $0x28] sm:$0xff]
    %v31 = vld [vmem:[#allocation2 + $0x30] sm:$0xff]
    %v32 = vld [vmem:[#allocation2 + $0x38] sm:$0xff]
    %v33 = vld [vmem:[#allocation2 + $0x40] sm:$0xff]
    %v34 = vld [vmem:[#allocation2 + $0x48] sm:$0xff]
    %v35 = vld [vmem:[#allocation2 + $0x50] sm:$0xff]
    %v36 = vld [vmem:[#allocation2 + $0x58] sm:$0xff]
    %v37 = vld [vmem:[#allocation2 + $0x60] sm:$0xff]
    %v38 = vld [vmem:[#allocation2 + $0x68] sm:$0xff]
    %v39 = vld [vmem:[#allocation2 + $0x70] sm:$0xff]
    %v40 = vld [vmem:[#allocation2 + $0x78] sm:$0xff]
    %v41 = vld [vmem:[#allocation2 + $0x80] sm:$0xff]
    %v42 = vld [vmem:[#allocation2 + $0x88] sm:$0xff]
    %v43 = vld [vmem:[#allocation2 + $0x90] sm:$0xff]
    %v44 = vld [vmem:[#allocation2 + $0x98] sm:$0xff]
    %v45 = vld [vmem:[#allocation2 + $0xa0] sm:$0xff]
    %v46 = vld [vmem:[#allocation2 + $0xa8] sm:$0xff]
    %v47 = vld [vmem:[#allocation2 + $0xb0] sm:$0xff]
    %v48 = vld [vmem:[#allocation2 + $0xb8] sm:$0xff]
    %v49 = vld [vmem:[#allocation2 + $0xc0] sm:$0xff]
    %v50 = vld [vmem:[#allocation2 + $0xc8] sm:$0xff]
    %v51 = vld [vmem:[#allocation2 + $0xd0] sm:$0xff]
    %v52 = vld [vmem:[#allocation2 + $0xd8] sm:$0xff]
    %v53 = vld [vmem:[#allocation2 + $0xe0] sm:$0xff]
    %v54 = vld [vmem:[#allocation2 + $0xe8] sm:$0xff]
    %v55 = vld [vmem:[#allocation2 + $0xf0] sm:$0xff]
    %v56 = vld [vmem:[#allocation2 + $0xf8] sm:$0xff]
    %v57 = vld [vmem:[#allocation2 + $0x100] sm:$0xff]
    %v58 = vld [vmem:[#allocation2 + $0x108] sm:$0xff]
    %v59 = vld [vmem:[#allocation2 + $0x110] sm:$0xff]
    %v60 = vld [vmem:[#allocation2 + $0x118] sm:$0xff]
    %v61 = vld [vmem:[#allocation2 + $0x120] sm:$0xff]
    %v62 = vld [vmem:[#allocation2 + $0x128] sm:$0xff]
    %v63 = vld [vmem:[#allocation2 + $0x130] sm:$0xff]
    %v64 = vld [vmem:[#allocation2 + $0x138] sm:$0xff]
    %v65 = vld [vmem:[#allocation2 + $0x140] sm:$0xff]
    %v66 = vld [vmem:[#allocation2 + $0x148] sm:$0xff]
    %v67 = vld [vmem:[#allocation2 + $0x150] sm:$0xff]
    %v68 = vld [vmem:[#allocation2 + $0x158] sm:$0xff]
    %v69 = vld [vmem:[#allocation2 + $0x160] sm:$0xff]
    %v70 = vld [vmem:[#allocation2 + $0x168] sm:$0xff]
    %v71 = vld [vmem:[#allocation2 + $0x170] sm:$0xff]
    %v72 = vld [vmem:[#allocation2 + $0x178] sm:$0xff]
    %v73 = vld [vmem:[#allocation2 + $0x180] sm:$0xff]
    %v74 = vld [vmem:[#allocation2 + $0x188] sm:$0xff]
    %v75 = vld [vmem:[#allocation2 + $0x190] sm:$0xff]
    %v76 = vld [vmem:[#allocation2 + $0x198] sm:$0xff]
    %v77 = vld [vmem:[#allocation2 + $0x1a0] sm:$0xff]
    %v78 = vld [vmem:[#allocation2 + $0x1a8] sm:$0xff]
    %v79 = vld [vmem:[#allocation2 + $0x1b0] sm:$0xff]
    %v80 = vld [vmem:[#allocation2 + $0x1b8] sm:$0xff]
    %v81 = vld [vmem:[#allocation2 + $0x1c0] sm:$0xff]
    %v82 = vld [vmem:[#allocation2 + $0x1c8] sm:$0xff]
    %v83 = vld [vmem:[#allocation2 + $0x1d0] sm:$0xff]
    %v84 = vld [vmem:[#allocation2 + $0x1d8] sm:$0xff]
    %v85 = vld [vmem:[#allocation2 + $0x1e0] sm:$0xff]
    %v86 = vld [vmem:[#allocation2 + $0x1e8] sm:$0xff]
    %v87 = vld [vmem:[#allocation2 + $0x1f0] sm:$0xff]
    %v88 = vld [vmem:[#allocation2 + $0x1f8] sm:$0xff]
    %v89 = vmul.f32 %v25, 0.5
    %v90 = vmul.f32 %v26, 0.5
    %v91 = vmul.f32 %v27, 0.5
    %v92 = vmul.f32 %v28, 0.5
    %v93 = vmul.f32 %v29, 0.5
    %v94 = vmul.f32 %v30, 0.5
    %v95 = vmul.f32 %v31, 0.5
    %v96 = vmul.f32 %v32, 0.5
    %v97 = vmul.f32 %v33, 0.5
    %v98 = vmul.f32 %v34, 0.5
    %v99 = vmul.f32 %v35, 0.5
    %v100 = vmul.f32 %v36, 0.5
    %v101 = vmul.f32 %v37, 0.5
    %v102 = vmul.f32 %v38, 0.5
    %v103 = vmul.f32 %v39, 0.5
    %v104 = vmul.f32 %v40, 0.5
    %v105 = vmul.f32 %v41, 0.5
    %v106 = vmul.f32 %v42, 0.5
    %v107 = vmul.f32 %v43, 0.5
    %v108 = vmul.f32 %v44, 0.5
    %v109 = vmul.f32 %v45, 0.5
    %v110 = vmul.f32 %v46, 0.5
    %v111 = vmul.f32 %v47, 0.5
    %v112 = vmul.f32 %v48, 0.5
    %v113 = vmul.f32 %v49, 0.5
    %v114 = vmul.f32 %v50, 0.5
    %v115 = vmul.f32 %v51, 0.5
    %v116 = vmul.f32 %v52, 0.5
    %v117 = vmul.f32 %v53, 0.5
    %v118 = vmul.f32 %v54, 0.5
    %v119 = vmul.f32 %v55, 0.5
    %v120 = vmul.f32 %v56, 0.5
    %v121 = vmul.f32 %v57, 0.5
    %v122 = vmul.f32 %v58, 0.5
    %v123 = vmul.f32 %v59, 0.5
    %v124 = vmul.f32 %v60, 0.5
    %v125 = vmul.f32 %v61, 0.5
    %v126 = vmul.f32 %v62, 0.5
    %v127 = vmul.f32 %v63, 0.5
    %v128 = vmul.f32 %v64, 0.5
    %v129 = vmul.f32 %v65, 0.5
    %v130 = vmul.f32 %v66, 0.5
    %v131 = vmul.f32 %v67, 0.5
    %v132 = vmul.f32 %v68, 0.5
    %v133 = vmul.f32 %v69, 0.5
    %v134 = vmul.f32 %v70, 0.5
    %v135 = vmul.f32 %v71, 0.5
    %v136 = vmul.f32 %v72, 0.5
    %v137 = vmul.f32 %v73, 0.5
    %v138 = vmul.f32 %v74, 0.5
    %v139 = vmul.f32 %v75, 0.5
    %v140 = vmul.f32 %v76, 0.5
    %v141 = vmul.f32 %v77, 0.5
    %v142 = vmul.f32 %v78, 0.5
    %v143 = vmul.f32 %v79, 0.5
    %v144 = vmul.f32 %v80, 0.5
    %v145 = vmul.f32 %v81, 0.5
    %v146 = vmul.f32 %v82, 0.5
    %v147 = vmul.f32 %v83, 0.5
    %v148 = vmul.f32 %v84, 0.5
    %v149 = vmul.f32 %v85, 0.5
    %v150 = vmul.f32 %v86, 0.5
    %v151 = vmul.f32 %v87, 0.5
    %v152 = vmul.f32 %v88, 0.5
    %v153 = vtanh.pop %v89
    %v154 = vtanh.pop %v90
    %v155 = vtanh.pop %v91
    %v156 = vtanh.pop %v92
    %v157 = vtanh.pop %v93
    %v158 = vtanh.pop %v94
    %v159 = vtanh.pop %v95
    %v160 = vtanh.pop %v96
    %v161 = vtanh.pop %v97
    %v162 = vtanh.pop %v98
    %v163 = vtanh.pop %v99
    %v164 = vtanh.pop %v100
    %v165 = vtanh.pop %v101
    %v166 = vtanh.pop %v102
    %v167 = vtanh.pop %v103
    %v168 = vtanh.pop %v104
    %v169 = vtanh.pop %v105
    %v170 = vtanh.pop %v106
    %v171 = vtanh.pop %v107
    %v172 = vtanh.pop %v108
    %v173 = vtanh.pop %v109
    %v174 = vtanh.pop %v110
    %v175 = vtanh.pop %v111
    %v176 = vtanh.pop %v112
    %v177 = vtanh.pop %v113
    %v178 = vtanh.pop %v114
    %v179 = vtanh.pop %v115
    %v180 = vtanh.pop %v116
    %v181 = vtanh.pop %v117
    %v182 = vtanh.pop %v118
    %v183 = vtanh.pop %v119
    %v184 = vtanh.pop %v120
    %v185 = vtanh.pop %v121
    %v186 = vtanh.pop %v122
    %v187 = vtanh.pop %v123
    %v188 = vtanh.pop %v124
    %v189 = vtanh.pop %v125
    %v190 = vtanh.pop %v126
    %v191 = vtanh.pop %v127
    %v192 = vtanh.pop %v128
    %v193 = vtanh.pop %v129
    %v194 = vtanh.pop %v130
    %v195 = vtanh.pop %v131
    %v196 = vtanh.pop %v132
    %v197 = vtanh.pop %v133
    %v198 = vtanh.pop %v134
    %v199 = vtanh.pop %v135
    %v200 = vtanh.pop %v136
    %v201 = vtanh.pop %v137
    %v202 = vtanh.pop %v138
    %v203 = vtanh.pop %v139
    %v204 = vtanh.pop %v140
    %v205 = vtanh.pop %v141
    %v206 = vtanh.pop %v142
    %v207 = vtanh.pop %v143
    %v208 = vtanh.pop %v144
    %v209 = vtanh.pop %v145
    %v210 = vtanh.pop %v146
    %v211 = vtanh.pop %v147
    %v212 = vtanh.pop %v148
    %v213 = vtanh.pop %v149
    %v214 = vtanh.pop %v150
    %v215 = vtanh.pop %v151
    %v216 = vtanh.pop %v152
    %v217 = vmul.f32 %v153, 0.5
    %v218 = vmul.f32 %v154, 0.5
    %v219 = vmul.f32 %v155, 0.5
    %v220 = vmul.f32 %v156, 0.5
    %v221 = vmul.f32 %v157, 0.5
    %v222 = vmul.f32 %v158, 0.5
    %v223 = vmul.f32 %v159, 0.5
    %v224 = vmul.f32 %v160, 0.5
    %v225 = vmul.f32 %v161, 0.5
    %v226 = vmul.f32 %v162, 0.5
    %v227 = vmul.f32 %v163, 0.5
    %v228 = vmul.f32 %v164, 0.5
    %v229 = vmul.f32 %v165, 0.5
    %v230 = vmul.f32 %v166, 0.5
    %v231 = vmul.f32 %v167, 0.5
    %v232 = vmul.f32 %v168, 0.5
    %v233 = vmul.f32 %v169, 0.5
    %v234 = vmul.f32 %v170, 0.5
    %v235 = vmul.f32 %v171, 0.5
    %v236 = vmul.f32 %v172, 0.5
    %v237 = vmul.f32 %v173, 0.5
    %v238 = vmul.f32 %v174, 0.5
    %v239 = vmul.f32 %v175, 0.5
    %v240 = vmul.f32 %v176, 0.5
    %v241 = vmul.f32 %v177, 0.5
    %v242 = vmul.f32 %v178, 0.5
    %v243 = vmul.f32 %v179, 0.5
    %v244 = vmul.f32 %v180, 0.5
    %v245 = vmul.f32 %v181, 0.5
    %v246 = vmul.f32 %v182, 0.5
    %v247 = vmul.f32 %v183, 0.5
    %v248 = vmul.f32 %v184, 0.5
    %v249 = vmul.f32 %v185, 0.5
    %v250 = vmul.f32 %v186, 0.5
    %v251 = vmul.f32 %v187, 0.5
    %v252 = vmul.f32 %v188, 0.5
    %v253 = vmul.f32 %v189, 0.5
    %v254 = vmul.f32 %v190, 0.5
    %v255 = vmul.f32 %v191, 0.5
    %v256 = vmul.f32 %v192, 0.5
    %v257 = vmul.f32 %v193, 0.5
    %v258 = vmul.f32 %v194, 0.5
    %v259 = vmul.f32 %v195, 0.5
    %v260 = vmul.f32 %v196, 0.5
    %v261 = vmul.f32 %v197, 0.5
    %v262 = vmul.f32 %v198, 0.5
    %v263 = vmul.f32 %v199, 0.5
    %v264 = vmul.f32 %v200, 0.5
    %v265 = vmul.f32 %v201, 0.5
    %v266 = vmul.f32 %v202, 0.5
    %v267 = vmul.f32 %v203, 0.5
    %v268 = vmul.f32 %v204, 0.5
    %v269 = vmul.f32 %v205, 0.5
    %v270 = vmul.f32 %v206, 0.5
    %v271 = vmul.f32 %v207, 0.5
    %v272 = vmul.f32 %v208, 0.5
    %v273 = vmul.f32 %v209, 0.5
    %v274 = vmul.f32 %v210, 0.5
    %v275 = vmul.f32 %v211, 0.5
    %v276 = vmul.f32 %v212, 0.5
    %v277 = vmul.f32 %v213, 0.5
    %v278 = vmul.f32 %v214, 0.5
    %v279 = vmul.f32 %v215, 0.5
    %v280 = vmul.f32 %v216, 0.5
    %v281 = vadd.f32 %v217, 0.5
    %v282 = vadd.f32 %v218, 0.5
    %v283 = vadd.f32 %v219, 0.5
    %v284 = vadd.f32 %v220, 0.5
    %v285 = vadd.f32 %v221, 0.5
    %v286 = vadd.f32 %v222, 0.5
    %v287 = vadd.f32 %v223, 0.5
    %v288 = vadd.f32 %v224, 0.5
    %v289 = vadd.f32 %v225, 0.5
    %v290 = vadd.f32 %v226, 0.5
    %v291 = vadd.f32 %v227, 0.5
    %v292 = vadd.f32 %v228, 0.5
    %v293 = vadd.f32 %v229, 0.5
    %v294 = vadd.f32 %v230, 0.5
    %v295 = vadd.f32 %v231, 0.5
    %v296 = vadd.f32 %v232, 0.5
    %v297 = vadd.f32 %v233, 0.5
    %v298 = vadd.f32 %v234, 0.5
    %v299 = vadd.f32 %v235, 0.5
    %v300 = vadd.f32 %v236, 0.5
    %v301 = vadd.f32 %v237, 0.5
    %v302 = vadd.f32 %v238, 0.5
    %v303 = vadd.f32 %v239, 0.5
    %v304 = vadd.f32 %v240, 0.5
    %v305 = vadd.f32 %v241, 0.5
    %v306 = vadd.f32 %v242, 0.5
    %v307 = vadd.f32 %v243, 0.5
    %v308 = vadd.f32 %v244, 0.5
    %v309 = vadd.f32 %v245, 0.5
    %v310 = vadd.f32 %v246, 0.5
    %v311 = vadd.f32 %v247, 0.5
    %v312 = vadd.f32 %v248, 0.5
    %v313 = vadd.f32 %v249, 0.5
    %v314 = vadd.f32 %v250, 0.5
    %v315 = vadd.f32 %v251, 0.5
    %v316 = vadd.f32 %v252, 0.5
    %v317 = vadd.f32 %v253, 0.5
    %v318 = vadd.f32 %v254, 0.5
    %v319 = vadd.f32 %v255, 0.5
    %v320 = vadd.f32 %v256, 0.5
    %v321 = vadd.f32 %v257, 0.5
    %v322 = vadd.f32 %v258, 0.5
    %v323 = vadd.f32 %v259, 0.5
    %v324 = vadd.f32 %v260, 0.5
    %v325 = vadd.f32 %v261, 0.5
    %v326 = vadd.f32 %v262, 0.5
    %v327 = vadd.f32 %v263, 0.5
    %v328 = vadd.f32 %v264, 0.5
    %v329 = vadd.f32 %v265, 0.5
    %v330 = vadd.f32 %v266, 0.5
    %v331 = vadd.f32 %v267, 0.5
    %v332 = vadd.f32 %v268, 0.5
    %v333 = vadd.f32 %v269, 0.5
    %v334 = vadd.f32 %v270, 0.5
    %v335 = vadd.f32 %v271, 0.5
    %v336 = vadd.f32 %v272, 0.5
    %v337 = vadd.f32 %v273, 0.5
    %v338 = vadd.f32 %v274, 0.5
    %v339 = vadd.f32 %v275, 0.5
    %v340 = vadd.f32 %v276, 0.5
    %v341 = vadd.f32 %v277, 0.5
    %v342 = vadd.f32 %v278, 0.5
    %v343 = vadd.f32 %v279, 0.5
    %v344 = vadd.f32 %v280, 0.5
    %345 = vst [vmem:[#allocation5] sm:$0xff] %v281
    %346 = vst [vmem:[#allocation5 + $0x8] sm:$0xff] %v282
    %347 = vst [vmem:[#allocation5 + $0x10] sm:$0xff] %v283
    %348 = vst [vmem:[#allocation5 + $0x18] sm:$0xff] %v284
    %349 = vst [vmem:[#allocation5 + $0x20] sm:$0xff] %v285
    %350 = vst [vmem:[#allocation5 + $0x28] sm:$0xff] %v286
    %351 = vst [vmem:[#allocation5 + $0x30] sm:$0xff] %v287
    %352 = vst [vmem:[#allocation5 + $0x38] sm:$0xff] %v288
    %353 = vst [vmem:[#allocation5 + $0x40] sm:$0xff] %v289
    %354 = vst [vmem:[#allocation5 + $0x48] sm:$0xff] %v290
    %355 = vst [vmem:[#allocation5 + $0x50] sm:$0xff] %v291
    %356 = vst [vmem:[#allocation5 + $0x58] sm:$0xff] %v292
    %357 = vst [vmem:[#allocation5 + $0x60] sm:$0xff] %v293
    %358 = vst [vmem:[#allocation5 + $0x68] sm:$0xff] %v294
    %359 = vst [vmem:[#allocation5 + $0x70] sm:$0xff] %v295
    %360 = vst [vmem:[#allocation5 + $0x78] sm:$0xff] %v296
    %361 = vst [vmem:[#allocation5 + $0x80] sm:$0xff] %v297
    %362 = vst [vmem:[#allocation5 + $0x88] sm:$0xff] %v298
    %363 = vst [vmem:[#allocation5 + $0x90] sm:$0xff] %v299
    %364 = vst [vmem:[#allocation5 + $0x98] sm:$0xff] %v300
    %365 = vst [vmem:[#allocation5 + $0xa0] sm:$0xff] %v301
    %366 = vst [vmem:[#allocation5 + $0xa8] sm:$0xff] %v302
    %367 = vst [vmem:[#allocation5 + $0xb0] sm:$0xff] %v303
    %368 = vst [vmem:[#allocation5 + $0xb8] sm:$0xff] %v304
    %369 = vst [vmem:[#allocation5 + $0xc0] sm:$0xff] %v305
    %370 = vst [vmem:[#allocation5 + $0xc8] sm:$0xff] %v306
    %371 = vst [vmem:[#allocation5 + $0xd0] sm:$0xff] %v307
    %372 = vst [vmem:[#allocation5 + $0xd8] sm:$0xff] %v308
    %373 = vst [vmem:[#allocation5 + $0xe0] sm:$0xff] %v309
    %374 = vst [vmem:[#allocation5 + $0xe8] sm:$0xff] %v310
    %375 = vst [vmem:[#allocation5 + $0xf0] sm:$0xff] %v311
    %376 = vst [vmem:[#allocation5 + $0xf8] sm:$0xff] %v312
    %377 = vst [vmem:[#allocation5 + $0x100] sm:$0xff] %v313
    %378 = vst [vmem:[#allocation5 + $0x108] sm:$0xff] %v314
    %379 = vst [vmem:[#allocation5 + $0x110] sm:$0xff] %v315
    %380 = vst [vmem:[#allocation5 + $0x118] sm:$0xff] %v316
    %381 = vst [vmem:[#allocation5 + $0x120] sm:$0xff] %v317
    %382 = vst [vmem:[#allocation5 + $0x128] sm:$0xff] %v318
    %383 = vst [vmem:[#allocation5 + $0x130] sm:$0xff] %v319
    %384 = vst [vmem:[#allocation5 + $0x138] sm:$0xff] %v320
    %385 = vst [vmem:[#allocation5 + $0x140] sm:$0xff] %v321
    %386 = vst [vmem:[#allocation5 + $0x148] sm:$0xff] %v322
    %387 = vst [vmem:[#allocation5 + $0x150] sm:$0xff] %v323
    %388 = vst [vmem:[#allocation5 + $0x158] sm:$0xff] %v324
    %389 = vst [vmem:[#allocation5 + $0x160] sm:$0xff] %v325
    %390 = vst [vmem:[#allocation5 + $0x168] sm:$0xff] %v326
    %391 = vst [vmem:[#allocation5 + $0x170] sm:$0xff] %v327
    %392 = vst [vmem:[#allocation5 + $0x178] sm:$0xff] %v328
    %393 = vst [vmem:[#allocation5 + $0x180] sm:$0xff] %v329
    %394 = vst [vmem:[#allocation5 + $0x188] sm:$0xff] %v330
    %395 = vst [vmem:[#allocation5 + $0x190] sm:$0xff] %v331
    %396 = vst [vmem:[#allocation5 + $0x198] sm:$0xff] %v332
    %397 = vst [vmem:[#allocation5 + $0x1a0] sm:$0xff] %v333
    %398 = vst [vmem:[#allocation5 + $0x1a8] sm:$0xff] %v334
    %399 = vst [vmem:[#allocation5 + $0x1b0] sm:$0xff] %v335
    %400 = vst [vmem:[#allocation5 + $0x1b8] sm:$0xff] %v336
    %401 = vst [vmem:[#allocation5 + $0x1c0] sm:$0xff] %v337
    %402 = vst [vmem:[#allocation5 + $0x1c8] sm:$0xff] %v338
    %403 = vst [vmem:[#allocation5 + $0x1d0] sm:$0xff] %v339
    %404 = vst [vmem:[#allocation5 + $0x1d8] sm:$0xff] %v340
    %405 = vst [vmem:[#allocation5 + $0x1e0] sm:$0xff] %v341
    %406 = vst [vmem:[#allocation5 + $0x1e8] sm:$0xff] %v342
    %407 = vst [vmem:[#allocation5 + $0x1f0] sm:$0xff] %v343
    %408 = vst [vmem:[#allocation5 + $0x1f8] sm:$0xff] %v344
    // Predicated region
    $region10: #{tpu_custom_call.1} parent=1 // pred_check
      _
    $region11: #{tpu_custom_call.1} parent=1 // pred_check_branch
      %410 = sbr.rel (0) target = $region13
    $region12: #{tpu_custom_call.1} parent=1 // pred_region
      %412 = vsyncadd [#allocation4], 0
      %s413 = sshll.u32 [#allocation5], 4
      %s414 = int_to_ptr.vmem [resolvable:$true] %s413
      %s415 = sshll.u32 %s1, 4
      %s416 = int_to_ptr.hbm [resolvable:$true] %s415
      %421 = dma.vmem_to_hbm [thread:$0]  %s414, 8192, %s416, [#allocation4], 2048, 2048, 128
    $region13: #{tpu_custom_call.1} parent=1 // pred_fallthru
      _
    // Predicated region
    $region14: #{tpu_custom_call.1} parent=1 // pred_check
      _
    $region15: #{tpu_custom_call.1} parent=1 // pred_check_branch
      %423 = sbr.rel (0) target = $region17
    $region16: #{tpu_custom_call.1} parent=1 // pred_region
      %425 = dma.done [#allocation4], 8192
    $region17: #{tpu_custom_call.1} parent=1 // pred_fallthru
      _
    %426 = vsyncpa [#allocation3], 1
    %427 = vsyncpa [#allocation4], 1

</llo_original>
